<compile_context>
chip_gen: v7x
topology: tpu7x:2x2x1
jax: 0.10.0
libtpu: 0.0.40
codegen_flags: <defaults>
</compile_context>

<pallas_src>
import functools

import jax
import jax.numpy as jnp
from jax import lax
from jax.experimental import pallas as pl
from jax.experimental.pallas import tpu as pltpu


def _unnorm(c, size):
    # align_corners=True unnormalization followed by 'border' clamp.
    c = (c + 1.0) * 0.5 * (size - 1)
    return jnp.clip(c, 0.0, float(max(size - 1, 0)))


def _corner_weights(coord, size, start, length, tn):
    """1-D linear interpolation weights.

    coord: (1, tn) border-clamped unnormalized coordinate (lane = vertex).
    Returns (length, tn) weights for grid indices [start, start + length).
    Clamped +1 corners duplicate an index, but then the fractional weight is 0
    or the two weights sum to 1 — identical to PyTorch 'border' semantics.
    """
    c0f = jnp.floor(coord)
    f = coord - c0f
    c0 = c0f.astype(jnp.int32)
    c1 = jnp.minimum(c0 + 1, size - 1)
    iota = lax.broadcasted_iota(jnp.int32, (length, tn), 0) + start
    return (jnp.where(iota == c0, 1.0 - f, 0.0)
            + jnp.where(iota == c1, f, 0.0))


def _skip_kernel_resident(vert_ref, vox_ref, out_ref, *, D, H, W):
    """Voxel-resident path: one grid step per (batch, vertex-tile).

    vert_ref: (1, 3, TN)      vertices (x, y, z) in [-1, 1], lane = vertex
    vox_ref : (1, C, D*H*W)   full voxel volume, lane = D*H*W (resident)
    out_ref : (1, C, TN)      sampled features (lane-dense in N)
    """
    v = vert_ref[0].astype(jnp.float32)            # (3, TN)
    tn = v.shape[1]

    x = _unnorm(v[0:1, :], W)
    y = _unnorm(v[1:2, :], H)
    z = _unnorm(v[2:3, :], D)

    wx = _corner_weights(x, W, 0, W, tn)           # (W, TN)
    wy = _corner_weights(y, H, 0, H, tn)           # (H, TN)
    wz = _corner_weights(z, D, 0, D, tn)           # (D, TN)

    # Separable trilinear weights -> one (D*H*W, TN) slab; z/y/x interpolation
    # all happen inside a single MXU contraction.
    wyx = (wy[:, None, :] * wx[None, :, :]).reshape(H * W, tn)
    w = (wz[:, None, :] * wyx[None, :, :]).reshape(D * H * W, tn)

    vox = vox_ref[0]                               # (C, D*H*W)
    out = jnp.dot(vox, w.astype(vox.dtype),
                  preferred_element_type=jnp.float32)   # (C, TN), f32 acc
    out_ref[0] = out.astype(out_ref.dtype)


def _skip_kernel_chunked(vert_ref, vox_ref, out_ref, acc_ref, wyx_ref,
                         *, D, H, W, TD):
    """z-chunked fallback for voxel volumes that do not fit VMEM.

    vert_ref: (1, 3, TN)       vertices
    vox_ref : (1, C, TD, H*W)  z-chunk of the voxel grid
    out_ref : (1, C, TN)       sampled features
    acc_ref : (C, TN)   f32    accumulator over z-chunks
    wyx_ref : (H*W, TN) f32    hoisted x-y weights (built once per vertex tile)
    """
    d_idx = pl.program_id(2)
    v = vert_ref[0].astype(jnp.float32)            # (3, TN)
    tn = v.shape[1]

    @pl.when(d_idx == 0)
    def _():
        acc_ref[...] = jnp.zeros_like(acc_ref)
        # Vertex-dependent x-y work is independent of the z-chunk: build once.
        x = _unnorm(v[0:1, :], W)
        y = _unnorm(v[1:2, :], H)
        wx = _corner_weights(x, W, 0, W, tn)
        wy = _corner_weights(y, H, 0, H, tn)
        wyx_ref[...] = (wy[:, None, :] * wx[None, :, :]).reshape(H * W, tn)

    z = _unnorm(v[2:3, :], D)
    wz = _corner_weights(z, D, d_idx * TD, TD, tn)        # (TD, TN)

    vox = vox_ref[0]                                      # (C, TD, HW)
    c = vox.shape[0]
    vox2d = vox.reshape(c * TD, H * W)
    t = jnp.dot(vox2d, wyx_ref[...].astype(vox2d.dtype),
                preferred_element_type=jnp.float32)       # (C*TD, TN)
    t = t.reshape(c, TD, tn)
    acc_ref[...] += jnp.sum(t * wz[None, :, :], axis=1)   # z interpolation

    @pl.when(d_idx == pl.num_programs(2) - 1)
    def _():
        out_ref[0] = acc_ref[...].astype(out_ref.dtype)


def _default_tn():
    try:
        kind = jax.devices()[0].device_kind.lower()
    except Exception:
        return 128
    # 256-wide MXUs (v6e / v7x) benefit from a 256-wide vertex tile; keep 128
    # on v5e and older (128-wide MXU tiles).
    return 256 if ("v6" in kind or "v7" in kind) else 128


def _vmem_budget():
    try:
        cap = getattr(pltpu.get_tpu_info(), "vmem_capacity_bytes", None)
        cap = cap or (64 * 2**20)
    except Exception:
        cap = 64 * 2**20          # v7x-safe fallback (64 MiB per TensorCore)
    return int(0.72 * cap)


def basic_skip_connection(voxel_features, vertices, *, tn=None,
                          bf16_voxels=True, td=None, force_chunked=False):
    """voxel_features: (B, C, D, H, W); vertices: (B, N, 3) in [-1, 1] (x, y, z).

    Returns (B, N, C), matching
    F.grid_sample(..., 'bilinear', 'border', align_corners=True)[:, :, :, 0, 0]
        .transpose(2, 1).
    """
    B, C, D, H, W = voxel_features.shape
    N = vertices.shape[1]
    HW = H * W
    DHW = D * HW

    out_dtype = voxel_features.dtype
    out_itemsize = jnp.dtype(out_dtype).itemsize
    vox_dtype = jnp.bfloat16 if bf16_voxels else voxel_features.dtype
    itemsize = jnp.dtype(vox_dtype).itemsize

    lane = lambda n: ((n + 127) // 128) * 128
    sub = lambda n: ((n + 7) // 8) * 8
    budget = _vmem_budget()

    if tn is None:
        tn = _default_tn()
    tn = max(128, min(tn, lane(N)))
    n_pad = ((N + tn - 1) // tn) * tn
    n_n = n_pad // tn

    # Lane-dense vertex layout (B, 3, N_pad); padded vertices sample the grid
    # centre (harmless) and are sliced off after the kernel.
    verts_t = jnp.transpose(vertices, (0, 2, 1)).astype(jnp.float32)
    if n_pad != N:
        verts_t = jnp.pad(verts_t, ((0, 0), (0, 0), (0, n_pad - N)))

    vert_blk = sub(3) * lane(tn) * 4
    out_blk = sub(C) * lane(tn) * out_itemsize
    headroom = 4 << 20

    # ---- Path A: whole voxel volume resident in VMEM, z folded into the MXU.
    vox_blk_a = sub(C) * lane(DHW) * itemsize
    w_bytes = (DHW + HW + D + H + W) * lane(tn) * 4
    work_a = w_bytes + sub(C) * lane(DHW) * 4 + 4 * sub(C) * lane(tn) * 4
    need_a = 2 * (vox_blk_a + vert_blk + out_blk) + work_a + headroom
    resident_ok = ((not force_chunked) and need_a <= budget
                   and DHW * lane(tn) * 4 <= (6 << 20))

    if resident_ok:
        # NCDHW -> (B, C, D*H*W): pure reshape (bitcast-level), lane dim is a
        # dense multiple of 128 even for small H*W.
        vox_in = voxel_features.reshape(B, C, DHW).astype(vox_dtype)
        kernel = functools.partial(_skip_kernel_resident, D=D, H=H, W=W)
        grid_spec = pltpu.PrefetchScalarGridSpec(
            num_scalar_prefetch=0,
            grid=(B, n_n),
            in_specs=[
                pl.BlockSpec((1, 3, tn), lambda b, n: (b, 0, n)),
                # Constant block index across n: voxel slab DMA'd once per
                # batch and kept resident (no per-vertex-tile re-streaming).
                pl.BlockSpec((1, C, DHW), lambda b, n: (b, 0, 0)),
            ],
            out_specs=pl.BlockSpec((1, C, tn), lambda b, n: (b, 0, n)),
            scratch_shapes=[],
        )
        dim_sem = ("parallel", "parallel")
        vox_hbm_bytes = B * C * DHW * itemsize
        vmem_limit = int(min(budget, need_a + (8 << 20)))
    else:
        # ---- Path B: chunk the z extent; f32 accumulator; hoisted wyx.
        if td is None:
            cands = [d for d in range(D, 0, -1)
                     if D % d == 0 and (d % 8 == 0 or d == D)]
            td = cands[-1]
            for c_ in cands:   # largest chunk that fits the budget
                blk = C * sub(c_) * lane(HW) * itemsize
                wrk = ((sub(HW) + 2 * sub(C)) * lane(tn) * 4
                       + C * sub(c_) * (lane(HW) + lane(tn)) * 4)
                if 2 * (blk + vert_blk + out_blk) + wrk + headroom <= budget:
                    td = c_
                    break
        assert D % td == 0, (D, td)
        n_d = D // td
        vox_in = voxel_features.reshape(B, C, D, HW).astype(vox_dtype)
        kernel = functools.partial(_skip_kernel_chunked, D=D, H=H, W=W, TD=td)
        grid_spec = pltpu.PrefetchScalarGridSpec(
            num_scalar_prefetch=0,
            grid=(B, n_n, n_d),
            in_specs=[
                pl.BlockSpec((1, 3, tn), lambda b, n, d: (b, 0, n)),
                pl.BlockSpec((1, C, td, HW), lambda b, n, d: (b, 0, d, 0)),
            ],
            out_specs=pl.BlockSpec((1, C, tn), lambda b, n, d: (b, 0, n)),
            scratch_shapes=[
                pltpu.VMEM((C, tn), jnp.float32),     # z accumulator
                pltpu.VMEM((HW, tn), jnp.float32),    # hoisted x-y weights
            ],
        )
        dim_sem = ("parallel", "parallel", "arbitrary")
        # td < D: the whole voxel volume is re-streamed once per vertex tile.
        vox_hbm_bytes = B * max(n_n, 1) * C * DHW * itemsize
        vox_blk_b = C * sub(td) * lane(HW) * itemsize
        work_b = ((sub(HW) + 2 * sub(C)) * lane(tn) * 4
                  + C * sub(td) * (lane(HW) + lane(tn)) * 4)
        vmem_limit = int(min(budget,
                             2 * (vox_blk_b + vert_blk + out_blk) + work_b
                             + (8 << 20)))

    cost = pl.CostEstimate(
        flops=2 * B * n_pad * C * DHW,
        transcendentals=0,
        bytes_accessed=int(vox_hbm_bytes + verts_t.size * 4
                           + B * C * n_pad * out_itemsize),
    )

    out_cn = pl.pallas_call(
        kernel,
        out_shape=jax.ShapeDtypeStruct((B, C, n_pad), out_dtype),
        grid_spec=grid_spec,
        compiler_params=pltpu.CompilerParams(
            dimension_semantics=dim_sem,
            vmem_limit_bytes=vmem_limit,
        ),
        cost_estimate=cost,
    )(verts_t, vox_in)

    # (B, C, N_pad) lane-dense kernel output -> (B, N, C) module output.
    return jnp.transpose(out_cn[:, :, :N], (0, 2, 1))


def _reference(voxel_features, vertices):
    """Pure-JAX reference of F.grid_sample(..., 'bilinear', 'border', True)."""
    B, C, D, H, W = voxel_features.shape
    vox = jnp.transpose(voxel_features, (0, 2, 3, 4, 1))  # (B, D, H, W, C)

    x = _unnorm(vertices[..., 0], W)   # (B, N)
    y = _unnorm(vertices[..., 1], H)
    z = _unnorm(vertices[..., 2], D)
    x0 = jnp.floor(x).astype(jnp.int32)
    y0 = jnp.floor(y).astype(jnp.int32)
    z0 = jnp.floor(z).astype(jnp.int32)
    fx, fy, fz = x - x0, y - y0, z - z0
    x1 = jnp.minimum(x0 + 1, W - 1)
    y1 = jnp.minimum(y0 + 1, H - 1)
    z1 = jnp.minimum(z0 + 1, D - 1)

    def gather(zi, yi, xi):
        return jax.vmap(lambda v, a, b_, c_: v[a, b_, c_])(vox, zi, yi, xi)

    out = (
        gather(z0, y0, x0) * ((1 - fz) * (1 - fy) * (1 - fx))[..., None]
        + gather(z0, y0, x1) * ((1 - fz) * (1 - fy) * fx)[..., None]
        + gather(z0, y1, x0) * ((1 - fz) * fy * (1 - fx))[..., None]
        + gather(z0, y1, x1) * ((1 - fz) * fy * fx)[..., None]
        + gather(z1, y0, x0) * (fz * (1 - fy) * (1 - fx))[..., None]
        + gather(z1, y0, x1) * (fz * (1 - fy) * fx)[..., None]
        + gather(z1, y1, x0) * (fz * fy * (1 - fx))[..., None]
        + gather(z1, y1, x1) * (fz * fy * fx)[..., None]
    )
    return out.astype(voxel_features.dtype)   # (B, N, C)


if __name__ == "__main__":
    # BasicSkipConnection.__init__ has no parameters, so nothing to initialize.
    key = jax.random.PRNGKey(0)
    k1, k2, k3, k4 = jax.random.split(key, 4)

    # ---- Shape 1: exercises the resident (path-A) kernel. ----
    B, C, D, H, W = 2, 8, 8, 8, 8
    N = 128
    voxel_features = jax.random.normal(k1, (B, C, D, H, W), dtype=jnp.float32)
    vertices = jax.random.uniform(k2, (B, N, 3), minval=-1.2, maxval=1.2,
                                  dtype=jnp.float32)    # beyond [-1,1] to hit border
    ref = jax.block_until_ready(_reference(voxel_features, vertices))

    # Strict f32 validation path.
    out_f32 = jax.block_until_ready(
        basic_skip_connection(voxel_features, vertices, bf16_voxels=False))
    assert out_f32.shape == (B, N, C), out_f32.shape
    assert jnp.allclose(out_f32, ref, rtol=1e-5, atol=1e-5), float(
        jnp.max(jnp.abs(out_f32 - ref)))

    # Default path (bf16 MXU operands, f32 accumulation): relaxed tolerance.
    out_bf16 = jax.block_until_ready(basic_skip_connection(voxel_features, vertices))
    assert jnp.allclose(out_bf16, ref, rtol=5e-2, atol=5e-2), float(
        jnp.max(jnp.abs(out_bf16 - ref)))

    # ---- Shape 2: exercises the chunked (path-B) fallback: z accumulation over
    # two chunks, the hoisted x-y weight scratch, and vertex-count padding. ----
    B2, C2, D2, H2, W2 = 1, 4, 16, 8, 8
    N2 = 200
    vox2 = jax.random.normal(k3, (B2, C2, D2, H2, W2), dtype=jnp.float32)
    verts2 = jax.random.uniform(k4, (B2, N2, 3), minval=-1.2, maxval=1.2,
                                dtype=jnp.float32)
    ref2 = jax.block_until_ready(_reference(vox2, verts2))
    out2 = jax.block_until_ready(
        basic_skip_connection(vox2, verts2, bf16_voxels=False,
                              force_chunked=True, td=8))
    assert out2.shape == (B2, N2, C2), out2.shape
    assert jnp.allclose(out2, ref2, rtol=1e-5, atol=1e-5), float(
        jnp.max(jnp.abs(out2 - ref2)))

    print("KERNEL_OK")
</pallas_src>

<mosaic_0001>
module attributes {stable_mosaic.version = 11 : i64} {
  func.func @_skip_kernel_resident(%arg0: i32, %arg1: i32, %arg2: memref<1x3x128xf32, #tpu.memory_space<vmem>>, %arg3: memref<1x8x512xf32, #tpu.memory_space<vmem>>, %arg4: memref<1x8x128xf32, #tpu.memory_space<vmem>>) attributes {dimension_semantics = [#tpu.dimension_semantics<parallel>, #tpu.dimension_semantics<parallel>], iteration_bounds = array<i64: 2, 1>, scalar_prefetch = 0 : i64, scratch_operands = 0 : i64, tpu.core_type = #tpu.core_type<tc>, window_params = [{transform_indices = @transform_0, window_bounds = array<i64: 1, 3, 128>}, {transform_indices = @transform_1, window_bounds = array<i64: 1, 8, 512>}, {transform_indices = @transform_2, window_bounds = array<i64: 1, 8, 128>}]} {
    %c0 = arith.constant 0 : index
    %c0_0 = arith.constant 0 : index
    %c0_1 = arith.constant 0 : index
    %0 = vector.load %arg2[%c0, %c0_0, %c0_1] : memref<1x3x128xf32, #tpu.memory_space<vmem>>, vector<1x3x128xf32>
    %1 = vector.shape_cast %0 : vector<1x3x128xf32> to vector<3x128xf32>
    %2 = vector.extract_strided_slice %1 {offsets = [0, 0], sizes = [1, 128], strides = [1, 1]} : vector<3x128xf32> to vector<1x128xf32>
    %cst = arith.constant 1.000000e+00 : f32
    %3 = vector.broadcast %cst : f32 to vector<1x128xf32>
    %4 = arith.addf %2, %3 : vector<1x128xf32>
    %cst_2 = arith.constant 5.000000e-01 : f32
    %5 = vector.broadcast %cst_2 : f32 to vector<1x128xf32>
    %6 = arith.mulf %4, %5 : vector<1x128xf32>
    %cst_3 = arith.constant 7.000000e+00 : f32
    %7 = vector.broadcast %cst_3 : f32 to vector<1x128xf32>
    %8 = arith.mulf %6, %7 : vector<1x128xf32>
    %cst_4 = arith.constant 0.000000e+00 : f32
    %cst_5 = arith.constant 7.000000e+00 : f32
    %9 = vector.broadcast %cst_4 : f32 to vector<1x128xf32>
    %10 = arith.maximumf %9, %8 : vector<1x128xf32>
    %11 = vector.broadcast %cst_5 : f32 to vector<1x128xf32>
    %12 = arith.minimumf %11, %10 : vector<1x128xf32>
    %13 = vector.extract_strided_slice %1 {offsets = [1, 0], sizes = [1, 128], strides = [1, 1]} : vector<3x128xf32> to vector<1x128xf32>
    %cst_6 = arith.constant 1.000000e+00 : f32
    %14 = vector.broadcast %cst_6 : f32 to vector<1x128xf32>
    %15 = arith.addf %13, %14 : vector<1x128xf32>
    %cst_7 = arith.constant 5.000000e-01 : f32
    %16 = vector.broadcast %cst_7 : f32 to vector<1x128xf32>
    %17 = arith.mulf %15, %16 : vector<1x128xf32>
    %cst_8 = arith.constant 7.000000e+00 : f32
    %18 = vector.broadcast %cst_8 : f32 to vector<1x128xf32>
    %19 = arith.mulf %17, %18 : vector<1x128xf32>
    %cst_9 = arith.constant 0.000000e+00 : f32
    %cst_10 = arith.constant 7.000000e+00 : f32
    %20 = vector.broadcast %cst_9 : f32 to vector<1x128xf32>
    %21 = arith.maximumf %20, %19 : vector<1x128xf32>
    %22 = vector.broadcast %cst_10 : f32 to vector<1x128xf32>
    %23 = arith.minimumf %22, %21 : vector<1x128xf32>
    %24 = vector.extract_strided_slice %1 {offsets = [2, 0], sizes = [1, 128], strides = [1, 1]} : vector<3x128xf32> to vector<1x128xf32>
    %cst_11 = arith.constant 1.000000e+00 : f32
    %25 = vector.broadcast %cst_11 : f32 to vector<1x128xf32>
    %26 = arith.addf %24, %25 : vector<1x128xf32>
    %cst_12 = arith.constant 5.000000e-01 : f32
    %27 = vector.broadcast %cst_12 : f32 to vector<1x128xf32>
    %28 = arith.mulf %26, %27 : vector<1x128xf32>
    %cst_13 = arith.constant 7.000000e+00 : f32
    %29 = vector.broadcast %cst_13 : f32 to vector<1x128xf32>
    %30 = arith.mulf %28, %29 : vector<1x128xf32>
    %cst_14 = arith.constant 0.000000e+00 : f32
    %cst_15 = arith.constant 7.000000e+00 : f32
    %31 = vector.broadcast %cst_14 : f32 to vector<1x128xf32>
    %32 = arith.maximumf %31, %30 : vector<1x128xf32>
    %33 = vector.broadcast %cst_15 : f32 to vector<1x128xf32>
    %34 = arith.minimumf %33, %32 : vector<1x128xf32>
    %35 = math.floor %12 : vector<1x128xf32>
    %36 = arith.subf %12, %35 : vector<1x128xf32>
    %37 = arith.fptosi %35 : vector<1x128xf32> to vector<1x128xi32>
    %c1_i32 = arith.constant 1 : i32
    %38 = vector.broadcast %c1_i32 : i32 to vector<1x128xi32>
    %39 = arith.addi %37, %38 : vector<1x128xi32>
    %c7_i32 = arith.constant 7 : i32
    %40 = vector.broadcast %c7_i32 : i32 to vector<1x128xi32>
    %41 = arith.minsi %39, %40 : vector<1x128xi32>
    %42 = tpu.iota {dimensions = array<i32: 0>} : vector<8x128xi32>
    %c0_i32 = arith.constant 0 : i32
    %43 = vector.broadcast %c0_i32 : i32 to vector<8x128xi32>
    %44 = arith.addi %42, %43 : vector<8x128xi32>
    %45 = vector.broadcast %37 : vector<1x128xi32> to vector<8x128xi32>
    %46 = arith.cmpi eq, %44, %45 : vector<8x128xi32>
    %cst_16 = arith.constant 1.000000e+00 : f32
    %47 = vector.broadcast %cst_16 : f32 to vector<1x128xf32>
    %48 = arith.subf %47, %36 : vector<1x128xf32>
    %cst_17 = arith.constant 0.000000e+00 : f32
    %49 = vector.shape_cast %48 : vector<1x128xf32> to vector<1x128xf32>
    %50 = vector.broadcast %49 : vector<1x128xf32> to vector<8x128xf32>
    %51 = vector.broadcast %cst_17 : f32 to vector<8x128xf32>
    %52 = arith.select %46, %50, %51 : vector<8x128xi1>, vector<8x128xf32>
    %53 = vector.broadcast %41 : vector<1x128xi32> to vector<8x128xi32>
    %54 = arith.cmpi eq, %44, %53 : vector<8x128xi32>
    %cst_18 = arith.constant 0.000000e+00 : f32
    %55 = vector.shape_cast %36 : vector<1x128xf32> to vector<1x128xf32>
    %56 = vector.broadcast %55 : vector<1x128xf32> to vector<8x128xf32>
    %57 = vector.broadcast %cst_18 : f32 to vector<8x128xf32>
    %58 = arith.select %54, %56, %57 : vector<8x128xi1>, vector<8x128xf32>
    %59 = arith.addf %52, %58 : vector<8x128xf32>
    %60 = math.floor %23 : vector<1x128xf32>
    %61 = arith.subf %23, %60 : vector<1x128xf32>
    %62 = arith.fptosi %60 : vector<1x128xf32> to vector<1x128xi32>
    %c1_i32_19 = arith.constant 1 : i32
    %63 = vector.broadcast %c1_i32_19 : i32 to vector<1x128xi32>
    %64 = arith.addi %62, %63 : vector<1x128xi32>
    %c7_i32_20 = arith.constant 7 : i32
    %65 = vector.broadcast %c7_i32_20 : i32 to vector<1x128xi32>
    %66 = arith.minsi %64, %65 : vector<1x128xi32>
    %67 = tpu.iota {dimensions = array<i32: 0>} : vector<8x128xi32>
    %c0_i32_21 = arith.constant 0 : i32
    %68 = vector.broadcast %c0_i32_21 : i32 to vector<8x128xi32>
    %69 = arith.addi %67, %68 : vector<8x128xi32>
    %70 = vector.broadcast %62 : vector<1x128xi32> to vector<8x128xi32>
    %71 = arith.cmpi eq, %69, %70 : vector<8x128xi32>
    %cst_22 = arith.constant 1.000000e+00 : f32
    %72 = vector.broadcast %cst_22 : f32 to vector<1x128xf32>
    %73 = arith.subf %72, %61 : vector<1x128xf32>
    %cst_23 = arith.constant 0.000000e+00 : f32
    %74 = vector.shape_cast %73 : vector<1x128xf32> to vector<1x128xf32>
    %75 = vector.broadcast %74 : vector<1x128xf32> to vector<8x128xf32>
    %76 = vector.broadcast %cst_23 : f32 to vector<8x128xf32>
    %77 = arith.select %71, %75, %76 : vector<8x128xi1>, vector<8x128xf32>
    %78 = vector.broadcast %66 : vector<1x128xi32> to vector<8x128xi32>
    %79 = arith.cmpi eq, %69, %78 : vector<8x128xi32>
    %cst_24 = arith.constant 0.000000e+00 : f32
    %80 = vector.shape_cast %61 : vector<1x128xf32> to vector<1x128xf32>
    %81 = vector.broadcast %80 : vector<1x128xf32> to vector<8x128xf32>
    %82 = vector.broadcast %cst_24 : f32 to vector<8x128xf32>
    %83 = arith.select %79, %81, %82 : vector<8x128xi1>, vector<8x128xf32>
    %84 = arith.addf %77, %83 : vector<8x128xf32>
    %85 = math.floor %34 : vector<1x128xf32>
    %86 = arith.subf %34, %85 : vector<1x128xf32>
    %87 = arith.fptosi %85 : vector<1x128xf32> to vector<1x128xi32>
    %c1_i32_25 = arith.constant 1 : i32
    %88 = vector.broadcast %c1_i32_25 : i32 to vector<1x128xi32>
    %89 = arith.addi %87, %88 : vector<1x128xi32>
    %c7_i32_26 = arith.constant 7 : i32
    %90 = vector.broadcast %c7_i32_26 : i32 to vector<1x128xi32>
    %91 = arith.minsi %89, %90 : vector<1x128xi32>
    %92 = tpu.iota {dimensions = array<i32: 0>} : vector<8x128xi32>
    %c0_i32_27 = arith.constant 0 : i32
    %93 = vector.broadcast %c0_i32_27 : i32 to vector<8x128xi32>
    %94 = arith.addi %92, %93 : vector<8x128xi32>
    %95 = vector.broadcast %87 : vector<1x128xi32> to vector<8x128xi32>
    %96 = arith.cmpi eq, %94, %95 : vector<8x128xi32>
    %cst_28 = arith.constant 1.000000e+00 : f32
    %97 = vector.broadcast %cst_28 : f32 to vector<1x128xf32>
    %98 = arith.subf %97, %86 : vector<1x128xf32>
    %cst_29 = arith.constant 0.000000e+00 : f32
    %99 = vector.shape_cast %98 : vector<1x128xf32> to vector<1x128xf32>
    %100 = vector.broadcast %99 : vector<1x128xf32> to vector<8x128xf32>
    %101 = vector.broadcast %cst_29 : f32 to vector<8x128xf32>
    %102 = arith.select %96, %100, %101 : vector<8x128xi1>, vector<8x128xf32>
    %103 = vector.broadcast %91 : vector<1x128xi32> to vector<8x128xi32>
    %104 = arith.cmpi eq, %94, %103 : vector<8x128xi32>
    %cst_30 = arith.constant 0.000000e+00 : f32
    %105 = vector.shape_cast %86 : vector<1x128xf32> to vector<1x128xf32>
    %106 = vector.broadcast %105 : vector<1x128xf32> to vector<8x128xf32>
    %107 = vector.broadcast %cst_30 : f32 to vector<8x128xf32>
    %108 = arith.select %104, %106, %107 : vector<8x128xi1>, vector<8x128xf32>
    %109 = arith.addf %102, %108 : vector<8x128xf32>
    %110 = vector.shape_cast %84 : vector<8x128xf32> to vector<8x1x128xf32>
    %111 = vector.shape_cast %59 : vector<8x128xf32> to vector<1x8x128xf32>
    %112 = vector.broadcast %110 : vector<8x1x128xf32> to vector<8x8x128xf32>
    %113 = vector.broadcast %111 : vector<1x8x128xf32> to vector<8x8x128xf32>
    %114 = arith.mulf %112, %113 : vector<8x8x128xf32>
    %115 = vector.shape_cast %114 : vector<8x8x128xf32> to vector<64x128xf32>
    %116 = vector.shape_cast %109 : vector<8x128xf32> to vector<8x1x128xf32>
    %117 = vector.shape_cast %115 : vector<64x128xf32> to vector<1x64x128xf32>
    %118 = vector.broadcast %116 : vector<8x1x128xf32> to vector<8x64x128xf32>
    %119 = vector.broadcast %117 : vector<1x64x128xf32> to vector<8x64x128xf32>
    %120 = arith.mulf %118, %119 : vector<8x64x128xf32>
    %121 = vector.shape_cast %120 : vector<8x64x128xf32> to vector<512x128xf32>
    %c0_31 = arith.constant 0 : index
    %c0_32 = arith.constant 0 : index
    %c0_33 = arith.constant 0 : index
    %122 = vector.load %arg3[%c0_31, %c0_32, %c0_33] : memref<1x8x512xf32, #tpu.memory_space<vmem>>, vector<1x8x512xf32>
    %123 = vector.shape_cast %122 : vector<1x8x512xf32> to vector<8x512xf32>
    %cst_34 = arith.constant dense<0.000000e+00> : vector<8x128xf32>
    %124 = tpu.matmul %123, %121, %cst_34 {dimension_numbers = #tpu.dot_dimension_numbers<[1], [0], [0], [1], [0, 0, 1, 1], [], []>} : vector<8x512xf32>, vector<512x128xf32>, vector<8x128xf32> -> vector<8x128xf32>
    %c0_35 = arith.constant 0 : index
    %c0_36 = arith.constant 0 : index
    %c0_37 = arith.constant 0 : index
    %125 = vector.load %arg4[%c0_35, %c0_36, %c0_37] : memref<1x8x128xf32, #tpu.memory_space<vmem>>, vector<1x8x128xf32>
    %126 = vector.shape_cast %125 : vector<1x8x128xf32> to vector<8x128xf32>
    %127 = vector.shape_cast %124 : vector<8x128xf32> to vector<1x8x128xf32>
    tpu.vector_store %arg4[%c0_35, %c0_36, %c0_37], %127 {strides = array<i32>} : memref<1x8x128xf32, #tpu.memory_space<vmem>>, vector<1x8x128xf32>,
    return
  }
  func.func @transform_0(%arg0: i32, %arg1: i32) -> (i32, i32, i32) {
    %c0_i32 = arith.constant 0 : i32
    %c0_i32_0 = arith.constant 0 : i32
    return %arg0, %c0_i32, %arg1 : i32, i32, i32
  }
  func.func @transform_1(%arg0: i32, %arg1: i32) -> (i32, i32, i32) {
    %c0_i32 = arith.constant 0 : i32
    %c0_i32_0 = arith.constant 0 : i32
    %c0_i32_1 = arith.constant 0 : i32
    return %arg0, %c0_i32, %c0_i32_0 : i32, i32, i32
  }
  func.func @transform_2(%arg0: i32, %arg1: i32) -> (i32, i32, i32) {
    %c0_i32 = arith.constant 0 : i32
    %c0_i32_0 = arith.constant 0 : i32
    return %arg0, %c0_i32, %arg1 : i32, i32, i32
  }
}

</mosaic_0001>

<llo_original>
// kernel: tpu_custom_call.1
$region0: #{tpu_custom_call.1}
  #allocation0 [shape = 'u32[]', space=smem, size = 0x4, offset = 0x4, fixed_abs, tag = 'smem constant byte address 0x4 - core index']
  #allocation1 [shape = 'u32[144,128]{1,0:T(1,128)}', space=vmem, size = 0x12000, scoped, tag = 'internal scratch']
  %s0 = inlined_call_operand.vmem [shape: f32[2,3,128], index: 0, kind: input, shape index: {}]
  %s1 = inlined_call_operand.hbm [shape: f32[2,8,512], index: 1, kind: input, shape index: {}]
  %s2 = inlined_call_operand.hbm [shape: f32[2,8,128], index: 2, kind: output, shape index: {}]
  %s3 = sld [smem:[#allocation0]]
  $region45: #{tpu_custom_call.1} parent=0
    _
  %s5 = ssub.s32 1, %s3
  %s6 = scalar_select 0, %s5, %s3
  $region1: #{tpu_custom_call.1} parent=0
    #allocation2 [shape = 'u8[32768]{0}', space=vmem, size = 0x8000, scoped, tag = 'input window, operand 1']
    #allocation3 [shape = 's32[2]{0}', space=sflag, size = 0x8, scoped, tag = 'scoped memory for tpu_custom_call.1']
    #allocation4 [shape = 's32[2]{0}', space=sflag, size = 0x8, scoped, tag = 'scoped memory for tpu_custom_call.1']
    #allocation5 [shape = 'u8[8192]{0}', space=vmem, size = 0x2000, scoped, tag = 'output window, operand 0']
    %7 = vsyncpa [#allocation3], 0
    %s8 = scalar_lea.sflag [#allocation3], 1
    %9 = vsyncpa %s8, 0
    %10 = vsyncpa [#allocation4], 0
    %s11 = scalar_lea.sflag [#allocation4], 1
    %12 = vsyncpa %s11, 0
    loop: start=0, step=1, limit=4
    $region2: #{tpu_custom_call.1} parent=1 // loop_pre_header
      _
    $region3: #{tpu_custom_call.1} parent=1 // loop_header
      %s14 = sphi 0, %s18
      %p15 = scmp.ge.s32.totalorder %s14, 4
      %s21 = sphi 0, %s33
      %s22 = sphi 0, %s29
      %s23 = sphi 0, %s21
      %s24 = sphi 0, %s22
      %s25 = sphi 0, %s23
      %s26 = sphi 0, %s24
      %s38 = sphi 0, %s40
      %s41 = sphi 0, %s38
      %s42 = sphi 0, %s41
      %s58 = sphi 0, %s42
      %s64 = sphi 0, %s66
      %s67 = sphi 0, %s64
      %s68 = sphi 0, %s67
      %s84 = sphi 0, %s68
      %s92 = sphi 0, %s94
      %s95 = sphi 0, %s92
      %s96 = sphi 0, %s95
      %s112 = sphi 0, %s96
    $region4: #{tpu_custom_call.1} parent=1 // loop_header_branch
      %17 = sbr.rel (%p15) target = $region8
    $region5: #{tpu_custom_call.1} parent=1 // loop_body
      %s19 = ssub.s32 %s14, 1
      %s20 = ssub.s32 %s14, 2
      %s27 = sadd.s32 1, %s22
      %p28 = scmp.ge.s32.totalorder %s27, 1
      %s29 = scalar_select %p28, 0, %s27
      %s30 = sadd.s32 1, %s21
      %s31 = scalar_select %p28, %s30, %s21
      %p32 = scmp.ge.s32.totalorder %s31, 2
      %s33 = scalar_select %p32, 0, %s31
      %s34 = ssub.s32 %s21, %s33
      %s35 = ssub.s32 %s22, %s29
      %s36 = sor.u32 %s34, %s35
      %p37 = scmp.eq.s32.totalorder %s36, 0
      %s39 = sadd.s32 %s38, 1
      %s40 = scalar_select %p37, %s38, %s39
      %p43 = pneg %p37
      %p44 = scmp.eq.s32.totalorder %s14, 1
      %p45 = por %p43, %p44
      %p46 = scmp.ne.s32.totalorder %s38, %s41
      %p47 = scmp.eq.s32.totalorder %s14, 0
      %p48 = por %p46, %p47
      %p49 = scmp.ne.s32.totalorder %s38, %s41
      %p50 = scmp.eq.s32.totalorder %s19, 1
      %p51 = por %p49, %p50
      %p52 = scmp.ne.s32.totalorder %s41, %s42
      %p53 = scmp.eq.s32.totalorder %s19, 0
      %p54 = por %p52, %p53
      %p55 = scmp.ne.s32.totalorder %s41, %s42
      %p56 = scmp.eq.s32.totalorder %s20, 1
      %p57 = por %p55, %p56
      %p59 = scmp.ne.s32.totalorder %s42, %s58
      %p60 = scmp.eq.s32.totalorder %s20, 0
      %p61 = por %p59, %p60
      %s62 = ssub.s32 %s21, %s33
      %p63 = scmp.eq.s32.totalorder %s62, 0
      %s65 = sadd.s32 %s64, 1
      %s66 = scalar_select %p63, %s64, %s65
      %p69 = pneg %p63
      %p70 = scmp.eq.s32.totalorder %s14, 1
      %p71 = por %p69, %p70
      %p72 = scmp.ne.s32.totalorder %s64, %s67
      %p73 = scmp.eq.s32.totalorder %s14, 0
      %p74 = por %p72, %p73
      %p75 = scmp.ne.s32.totalorder %s64, %s67
      %p76 = scmp.eq.s32.totalorder %s19, 1
      %p77 = por %p75, %p76
      %p78 = scmp.ne.s32.totalorder %s67, %s68
      %p79 = scmp.eq.s32.totalorder %s19, 0
      %p80 = por %p78, %p79
      %p81 = scmp.ne.s32.totalorder %s67, %s68
      %p82 = scmp.eq.s32.totalorder %s20, 1
      %p83 = por %p81, %p82
      %p85 = scmp.ne.s32.totalorder %s68, %s84
      %p86 = scmp.eq.s32.totalorder %s20, 0
      %p87 = por %p85, %p86
      %s88 = ssub.s32 %s21, %s33
      %s89 = ssub.s32 %s22, %s29
      %s90 = sor.u32 %s88, %s89
      %p91 = scmp.eq.s32.totalorder %s90, 0
      %s93 = sadd.s32 %s92, 1
      %s94 = scalar_select %p91, %s92, %s93
      %p97 = pneg %p91
      %p98 = scmp.eq.s32.totalorder %s14, 1
      %p99 = por %p97, %p98
      %p100 = scmp.ne.s32.totalorder %s92, %s95
      %p101 = scmp.eq.s32.totalorder %s14, 0
      %p102 = por %p100, %p101
      %p103 = scmp.ne.s32.totalorder %s92, %s95
      %p104 = scmp.eq.s32.totalorder %s19, 1
      %p105 = por %p103, %p104
      %p106 = scmp.ne.s32.totalorder %s95, %s96
      %p107 = scmp.eq.s32.totalorder %s19, 0
      %p108 = por %p106, %p107
      %p109 = scmp.ne.s32.totalorder %s95, %s96
      %p110 = scmp.eq.s32.totalorder %s20, 1
      %p111 = por %p109, %p110
      %p113 = scmp.ne.s32.totalorder %s96, %s112
      %p114 = scmp.eq.s32.totalorder %s20, 0
      %p115 = por %p113, %p114
      %p116 = scmp.le.s32.totalorder 1, %s14
      %p117 = scmp.lt.s32.totalorder %s14, 3
      %p118 = pnand %p116, %p117
      %p119 = pneg %p118
      // Predicated region
      $region9: #{tpu_custom_call.1} parent=5 // pred_check
        _
      $region10: #{tpu_custom_call.1} parent=5 // pred_check_branch
        %121 = sbr.rel (%p118) target = $region12
      $region11: #{tpu_custom_call.1} parent=5 // pred_region
        %s122 = ssub.s32 %s14, 1
      $region12: #{tpu_custom_call.1} parent=5 // pred_fallthru
        _
      %p123 = scmp.lt.s32.totalorder %s14, 2
      // Predicated region
      $region13: #{tpu_custom_call.1} parent=5 // pred_check
        %p124 = pneg %p123
      $region14: #{tpu_custom_call.1} parent=5 // pred_check_branch
        %126 = sbr.rel (%p124) target = $region16
      $region15: #{tpu_custom_call.1} parent=5 // pred_region
        // Predicated region
        $region17: #{tpu_custom_call.1} parent=15 // pred_check
          %p127 = pneg %p48
        $region18: #{tpu_custom_call.1} parent=15 // pred_check_branch
          %129 = sbr.rel (%p127) target = $region20
        $region19: #{tpu_custom_call.1} parent=15 // pred_region
          %p130 = scmp.lt.s32.totalorder %s21, 1
          %s131 = scalar_select %p130, %s21, 1
          %p132 = scmp.lt.s32.totalorder %s22, 0
          %s133 = scalar_select %p132, %s22, 0
          %s134 = sadd.s32 %s133, %s131
          %s135 = smul.addr %s134, 4
          %s136 = scalar_lea.vmem %s0, %s135
        $region20: #{tpu_custom_call.1} parent=15 // pred_fallthru
          _
        // Predicated region
        $region21: #{tpu_custom_call.1} parent=15 // pred_check
          %p137 = pneg %p74
        $region22: #{tpu_custom_call.1} parent=15 // pred_check_branch
          %139 = sbr.rel (%p137) target = $region24
        $region23: #{tpu_custom_call.1} parent=15 // pred_region
          %s140 = sand.u32 %s64, 1
          %s141 = scalar_lea.sflag [#allocation3], %s140
          %s142 = sand.u32 %s64, 1
          %s143 = smul.addr %s142, 32
          %s144 = scalar_lea.vmem [#allocation2], %s143
          %s146 = ssub.s32 512, 512
          %147 = vsyncadd %s141, %s146
          %s148 = smul.addr %s21, 4
          %s149 = smul.addr %s148, 128
          %s150 = scalar_lea.hbm %s1, %s149
          %s152 = sshll.u32 %s144, 4
          %s153 = int_to_ptr.vmem [resolvable:$true] %s152
          %155 = dma.hbm_to_vmem [thread:$0]  %s150, 512, %s153, %s141
        $region24: #{tpu_custom_call.1} parent=15 // pred_fallthru
          _
      $region16: #{tpu_custom_call.1} parent=5 // pred_fallthru
        _
      %p156 = scmp.le.s32.totalorder 1, %s14
      %p157 = scmp.lt.s32.totalorder %s14, 3
      %p158 = pnand %p156, %p157
      %p159 = pneg %p158
      // Predicated region
      $region25: #{tpu_custom_call.1} parent=5 // pred_check
        _
      $region26: #{tpu_custom_call.1} parent=5 // pred_check_branch
        %161 = sbr.rel (%p158) target = $region28
      $region27: #{tpu_custom_call.1} parent=5 // pred_region
        %s162 = ssub.s32 %s14, 1
        %s163 = sand.u32 %s67, 1
        %s164 = scalar_lea.sflag [#allocation3], %s163
        %s165 = sand.u32 %s67, 1
        %s166 = smul.addr %s165, 32
        %s167 = scalar_lea.vmem [#allocation2], %s166
        // Predicated region
        $region29: #{tpu_custom_call.1} parent=27 // pred_check
          %p168 = pneg %p80
        $region30: #{tpu_custom_call.1} parent=27 // pred_check_branch
          %170 = sbr.rel (%p168) target = $region32
        $region31: #{tpu_custom_call.1} parent=27 // pred_region
          %171 = dma.done %s164, 512
        $region32: #{tpu_custom_call.1} parent=27 // pred_fallthru
          _
        %p172 = scmp.lt.s32.totalorder %s23, 1
        %s173 = scalar_select %p172, %s23, 1
        %p174 = scmp.lt.s32.totalorder %s24, 0
        %s175 = scalar_select %p174, %s24, 0
        %s176 = sadd.s32 %s175, %s173
        %s177 = smul.addr %s176, 4
        %s178 = scalar_lea.vmem %s0, %s177
        %p179 = pneg %p54
        %p180 = pneg %p51
        %s181 = sand.u32 %s67, 1
        %s182 = scalar_lea.sflag [#allocation3], %s181
        %s183 = sand.u32 %s67, 1
        %s184 = smul.addr %s183, 32
        %s185 = scalar_lea.vmem [#allocation2], %s184
        %p186 = pneg %p80
        %p187 = pneg %p77
        %p188 = pneg %p108
        %p189 = pneg %p105
        %s190 = sand.u32 %s95, 1
        %s191 = scalar_lea.sflag [#allocation4], %s190
        %s192 = sand.u32 %s95, 1
        %s193 = smul.addr %s192, 8
        %s194 = scalar_lea.vmem [#allocation5], %s193
        %p195 = scmp.lt.s32.totalorder %s23, 1
        %s196 = scalar_select %p195, %s23, 1
        %p197 = scmp.lt.s32.totalorder %s24, 0
        %s198 = scalar_select %p197, %s24, 0
        %s199 = sadd.s32 %s198, %s196
        %s200 = smul.addr %s199, 4
        %s201 = scalar_lea.vmem %s0, %s200
        %v202 = vld [vmem:[%s201] sm:$0x7]
        %v203 = vadd.f32 %v202, 1.0
        %v204 = vmul.f32 %v203, 0.5
        %v205 = vmul.f32 %v204, 7.0
        %v206 = vmax.f32 %v205, 0.0
        %v207 = vmin.f32 %v206, 7.0
        %v208 = vfloor.f32 %v207
        %v209 = vsub.f32 %v207, %v208
        %v210 = vcvt.f32.s32.to.zero.pseudo %v208
        %v211 = vadd.s32 %v210, 1
        %vm212 = vcmp.lt.s32.totalorder %v211, 7
        %v213 = vsel %vm212, %v211, 7
        %v214 = vlaneseq
        %v215 = vshrl.u32 %v214, 7
        %v216 = vlaneseq
        %v217 = vshrl.u32 %v216, 7
        %v218 = vsub.s32 0, %v217
        %v219 = vrot.slane %v210, %v218
        %vm220 = vcmp.eq.s32.totalorder %v215, %v219
        %v221 = vsub.f32 1.0, %v209
        %v222 = vlaneseq
        %v223 = vshrl.u32 %v222, 7
        %v224 = vsub.s32 0, %v223
        %v225 = vrot.slane %v221, %v224
        %v226 = vsel %vm220, %v225, 0.0
        %v227 = vlaneseq
        %v228 = vshrl.u32 %v227, 7
        %v229 = vsub.s32 0, %v228
        %v230 = vrot.slane %v213, %v229
        %vm231 = vcmp.eq.s32.totalorder %v215, %v230
        %v232 = vlaneseq
        %v233 = vshrl.u32 %v232, 7
        %v234 = vsub.s32 0, %v233
        %v235 = vrot.slane %v209, %v234
        %v236 = vsel %vm231, %v235, 0.0
        %v237 = vadd.f32 %v226, %v236
        %v238 = vlaneseq
        %v239 = vshrl.u32 %v238, 7
        %v240 = vsub.s32 1, %v239
        %v241 = vrot.slane %v210, %v240
        %vm242 = vcmp.eq.s32.totalorder %v215, %v241
        %v243 = vlaneseq
        %v244 = vshrl.u32 %v243, 7
        %v245 = vsub.s32 1, %v244
        %v246 = vrot.slane %v221, %v245
        %v247 = vsel %vm242, %v246, 0.0
        %v248 = vlaneseq
        %v249 = vshrl.u32 %v248, 7
        %v250 = vsub.s32 1, %v249
        %v251 = vrot.slane %v213, %v250
        %vm252 = vcmp.eq.s32.totalorder %v215, %v251
        %v253 = vlaneseq
        %v254 = vshrl.u32 %v253, 7
        %v255 = vsub.s32 1, %v254
        %v256 = vrot.slane %v209, %v255
        %v257 = vsel %vm252, %v256, 0.0
        %v258 = vadd.f32 %v247, %v257
        %v259 = vlaneseq
        %v260 = vshrl.u32 %v259, 7
        %v261 = vsub.s32 2, %v260
        %v262 = vrot.slane %v210, %v261
        %vm263 = vcmp.eq.s32.totalorder %v215, %v262
        %v264 = vlaneseq
        %v265 = vshrl.u32 %v264, 7
        %v266 = vsub.s32 2, %v265
        %v267 = vrot.slane %v221, %v266
        %v268 = vsel %vm263, %v267, 0.0
        %v269 = vlaneseq
        %v270 = vshrl.u32 %v269, 7
        %v271 = vsub.s32 2, %v270
        %v272 = vrot.slane %v213, %v271
        %vm273 = vcmp.eq.s32.totalorder %v215, %v272
        %v274 = vlaneseq
        %v275 = vshrl.u32 %v274, 7
        %v276 = vsub.s32 2, %v275
        %v277 = vrot.slane %v209, %v276
        %v278 = vsel %vm273, %v277, 0.0
        %v279 = vadd.f32 %v268, %v278
        %v281 = vcombine.high %v258, %v258
        %v283 = vunpack.c.l.s4 1966171168
        %v284 = vunpack.c.0.s8 %v283
        %v285 = vlaneseq
        %v286 = vshrl.u32 %v285, 7
        %v287 = vsub.s32 %v284, %v286
        %v288 = vrot.slane %v258, %v287
        %v290 = vunpack.c.l.s4 1966171168
        %v291 = vunpack.c.0.s8 %v290
        %v292 = vlaneseq
        %v293 = vshrl.u32 %v292, 7
        %v294 = vsub.s32 %v291, %v293
        %v295 = vrot.slane %v281, %v294
        %v296 = vcombine.high %v288, %v288
        %v297 = vcombine.high %v295, %v295
        %v299 = vunpack.c.l.s4 1966171168
        %v300 = vunpack.c.0.s8 %v299
        %v301 = vlaneseq
        %v302 = vshrl.u32 %v301, 7
        %v303 = vsub.s32 %v300, %v302
        %v304 = vrot.slane %v288, %v303
        %v306 = vunpack.c.l.s4 1966171168
        %v307 = vunpack.c.0.s8 %v306
        %v308 = vlaneseq
        %v309 = vshrl.u32 %v308, 7
        %v310 = vsub.s32 %v307, %v309
        %v311 = vrot.slane %v295, %v310
        %v313 = vunpack.c.l.s4 1966171168
        %v314 = vunpack.c.0.s8 %v313
        %v315 = vlaneseq
        %v316 = vshrl.u32 %v315, 7
        %v317 = vsub.s32 %v314, %v316
        %v318 = vrot.slane %v296, %v317
        %v320 = vunpack.c.l.s4 1966171168
        %v321 = vunpack.c.0.s8 %v320
        %v322 = vlaneseq
        %v323 = vshrl.u32 %v322, 7
        %v324 = vsub.s32 %v321, %v323
        %v325 = vrot.slane %v297, %v324
        %v326 = vcombine.high %v304, %v304
        %v327 = vcombine.high %v311, %v311
        %v328 = vcombine.high %v318, %v318
        %v329 = vcombine.high %v325, %v325
        %v330 = vlaneseq
        %v331 = vshrl.u32 %v330, 7
        %v332 = vsub.s32 0, %v331
        %v333 = vrot.slane %v304, %v332
        %v334 = vlaneseq
        %v335 = vshrl.u32 %v334, 7
        %v336 = vsub.s32 0, %v335
        %v337 = vrot.slane %v318, %v336
        %v338 = vlaneseq
        %v339 = vshrl.u32 %v338, 7
        %v340 = vsub.s32 0, %v339
        %v341 = vrot.slane %v326, %v340
        %v342 = vlaneseq
        %v343 = vshrl.u32 %v342, 7
        %v344 = vsub.s32 0, %v343
        %v345 = vrot.slane %v328, %v344
        %v346 = vlaneseq
        %v347 = vshrl.u32 %v346, 7
        %v348 = vsub.s32 0, %v347
        %v349 = vrot.slane %v311, %v348
        %v350 = vlaneseq
        %v351 = vshrl.u32 %v350, 7
        %v352 = vsub.s32 0, %v351
        %v353 = vrot.slane %v325, %v352
        %v354 = vlaneseq
        %v355 = vshrl.u32 %v354, 7
        %v356 = vsub.s32 0, %v355
        %v357 = vrot.slane %v327, %v356
        %v358 = vlaneseq
        %v359 = vshrl.u32 %v358, 7
        %v360 = vsub.s32 0, %v359
        %v361 = vrot.slane %v329, %v360
        %v370 = vmul.f32 %v333, %v237
        %v371 = vmul.f32 %v337, %v237
        %v372 = vmul.f32 %v341, %v237
        %v373 = vmul.f32 %v345, %v237
        %v374 = vmul.f32 %v349, %v237
        %v375 = vmul.f32 %v353, %v237
        %v376 = vmul.f32 %v357, %v237
        %v377 = vmul.f32 %v361, %v237
        %v379 = vcombine.high %v279, %v279
        %v381 = vunpack.c.l.s4 1966171168
        %v382 = vunpack.c.0.s8 %v381
        %v383 = vlaneseq
        %v384 = vshrl.u32 %v383, 7
        %v385 = vsub.s32 %v382, %v384
        %v386 = vrot.slane %v279, %v385
        %v388 = vunpack.c.l.s4 1966171168
        %v389 = vunpack.c.0.s8 %v388
        %v390 = vlaneseq
        %v391 = vshrl.u32 %v390, 7
        %v392 = vsub.s32 %v389, %v391
        %v393 = vrot.slane %v379, %v392
        %v394 = vcombine.high %v386, %v386
        %v395 = vcombine.high %v393, %v393
        %v397 = vunpack.c.l.s4 1966171168
        %v398 = vunpack.c.0.s8 %v397
        %v399 = vlaneseq
        %v400 = vshrl.u32 %v399, 7
        %v401 = vsub.s32 %v398, %v400
        %v402 = vrot.slane %v386, %v401
        %v404 = vunpack.c.l.s4 1966171168
        %v405 = vunpack.c.0.s8 %v404
        %v406 = vlaneseq
        %v407 = vshrl.u32 %v406, 7
        %v408 = vsub.s32 %v405, %v407
        %v409 = vrot.slane %v393, %v408
        %v411 = vunpack.c.l.s4 1966171168
        %v412 = vunpack.c.0.s8 %v411
        %v413 = vlaneseq
        %v414 = vshrl.u32 %v413, 7
        %v415 = vsub.s32 %v412, %v414
        %v416 = vrot.slane %v394, %v415
        %v418 = vunpack.c.l.s4 1966171168
        %v419 = vunpack.c.0.s8 %v418
        %v420 = vlaneseq
        %v421 = vshrl.u32 %v420, 7
        %v422 = vsub.s32 %v419, %v421
        %v423 = vrot.slane %v395, %v422
        %v424 = vcombine.high %v402, %v402
        %v425 = vcombine.high %v409, %v409
        %v426 = vcombine.high %v416, %v416
        %v427 = vcombine.high %v423, %v423
        %v428 = vlaneseq
        %v429 = vshrl.u32 %v428, 7
        %v430 = vsub.s32 0, %v429
        %v431 = vrot.slane %v402, %v430
        %v432 = vlaneseq
        %v433 = vshrl.u32 %v432, 7
        %v434 = vsub.s32 0, %v433
        %v435 = vrot.slane %v416, %v434
        %v436 = vlaneseq
        %v437 = vshrl.u32 %v436, 7
        %v438 = vsub.s32 0, %v437
        %v439 = vrot.slane %v424, %v438
        %v440 = vlaneseq
        %v441 = vshrl.u32 %v440, 7
        %v442 = vsub.s32 0, %v441
        %v443 = vrot.slane %v426, %v442
        %v444 = vlaneseq
        %v445 = vshrl.u32 %v444, 7
        %v446 = vsub.s32 0, %v445
        %v447 = vrot.slane %v409, %v446
        %v448 = vlaneseq
        %v449 = vshrl.u32 %v448, 7
        %v450 = vsub.s32 0, %v449
        %v451 = vrot.slane %v423, %v450
        %v452 = vlaneseq
        %v453 = vshrl.u32 %v452, 7
        %v454 = vsub.s32 0, %v453
        %v455 = vrot.slane %v425, %v454
        %v456 = vlaneseq
        %v457 = vshrl.u32 %v456, 7
        %v458 = vsub.s32 0, %v457
        %v459 = vrot.slane %v427, %v458
        %v468 = vmul.f32 %v431, %v370
        %v469 = vmul.f32 %v431, %v371
        %v470 = vmul.f32 %v431, %v372
        %v471 = vmul.f32 %v431, %v373
        %v472 = vmul.f32 %v431, %v374
        %v473 = vmul.f32 %v431, %v375
        %v474 = vmul.f32 %v431, %v376
        %v475 = vmul.f32 %v431, %v377
        %v476 = vmul.f32 %v435, %v370
        %v477 = vmul.f32 %v435, %v371
        %v478 = vmul.f32 %v435, %v372
        %v479 = vmul.f32 %v435, %v373
        %v480 = vmul.f32 %v435, %v374
        %v481 = vmul.f32 %v435, %v375
        %v482 = vmul.f32 %v435, %v376
        %v483 = vmul.f32 %v435, %v377
        %v484 = vmul.f32 %v439, %v370
        %v485 = vmul.f32 %v439, %v371
        %v486 = vmul.f32 %v439, %v372
        %v487 = vmul.f32 %v439, %v373
        %v488 = vmul.f32 %v439, %v374
        %v489 = vmul.f32 %v439, %v375
        %v490 = vmul.f32 %v439, %v376
        %v491 = vmul.f32 %v439, %v377
        %v492 = vmul.f32 %v443, %v370
        %v493 = vmul.f32 %v443, %v371
        %v494 = vmul.f32 %v443, %v372
        %v495 = vmul.f32 %v443, %v373
        %v496 = vmul.f32 %v443, %v374
        %v497 = vmul.f32 %v443, %v375
        %v498 = vmul.f32 %v443, %v376
        %v499 = vmul.f32 %v443, %v377
        %v500 = vmul.f32 %v447, %v370
        %v501 = vmul.f32 %v447, %v371
        %v502 = vmul.f32 %v447, %v372
        %v503 = vmul.f32 %v447, %v373
        %v504 = vmul.f32 %v447, %v374
        %v505 = vmul.f32 %v447, %v375
        %v506 = vmul.f32 %v447, %v376
        %v507 = vmul.f32 %v447, %v377
        %v508 = vmul.f32 %v451, %v370
        %v509 = vmul.f32 %v451, %v371
        %v510 = vmul.f32 %v451, %v372
        %v511 = vmul.f32 %v451, %v373
        %v512 = vmul.f32 %v451, %v374
        %v513 = vmul.f32 %v451, %v375
        %v514 = vmul.f32 %v451, %v376
        %v515 = vmul.f32 %v451, %v377
        %v516 = vmul.f32 %v455, %v370
        %v517 = vmul.f32 %v455, %v371
        %v518 = vmul.f32 %v455, %v372
        %v519 = vmul.f32 %v455, %v373
        %v520 = vmul.f32 %v455, %v374
        %v521 = vmul.f32 %v455, %v375
        %v522 = vmul.f32 %v455, %v376
        %v523 = vmul.f32 %v455, %v377
        %v524 = vmul.f32 %v459, %v370
        %v525 = vmul.f32 %v459, %v371
        %v526 = vmul.f32 %v459, %v372
        %v527 = vmul.f32 %v459, %v373
        %v528 = vmul.f32 %v459, %v374
        %v529 = vmul.f32 %v459, %v375
        %v530 = vmul.f32 %v459, %v376
        %v531 = vmul.f32 %v459, %v377
        %v532 = vld [vmem:[%s167] sm:$0xff]
        %v533 = vld [vmem:[%s167 + $0x8] sm:$0xff]
        %v534 = vld [vmem:[%s167 + $0x10] sm:$0xff]
        %v535 = vld [vmem:[%s167 + $0x18] sm:$0xff]
        %536 = vmatprep.subr.mxu0 0.0
        %537 = vmatpush1.msra.mxu0 %v468
        %538 = vmatprep.subr.mxu0 0.0
        %539 = vmatpush1.msra.mxu0 %v469
        %540 = vmatprep.subr.mxu0 0.0
        %541 = vmatpush1.msra.mxu0 %v470
        %542 = vmatprep.subr.mxu0 0.0
        %543 = vmatpush1.msra.mxu0 %v471
        %544 = vmatprep.subr.mxu0 0.0
        %545 = vmatpush1.msra.mxu0 %v472
        %546 = vmatprep.subr.mxu0 0.0
        %547 = vmatpush1.msra.mxu0 %v473
        %548 = vmatprep.subr.mxu0 0.0
        %549 = vmatpush1.msra.mxu0 %v474
        %550 = vmatprep.subr.mxu0 0.0
        %551 = vmatpush1.msra.mxu0 %v475
        %552 = vmatprep.subr.mxu0 0.0
        %553 = vmatpush1.msra.mxu0 %v476
        %554 = vmatprep.subr.mxu0 0.0
        %555 = vmatpush1.msra.mxu0 %v477
        %556 = vmatprep.subr.mxu0 0.0
        %557 = vmatpush1.msra.mxu0 %v478
        %558 = vmatprep.subr.mxu0 0.0
        %559 = vmatpush1.msra.mxu0 %v479
        %560 = vmatprep.subr.mxu0 0.0
        %561 = vmatpush1.msra.mxu0 %v480
        %562 = vmatprep.subr.mxu0 0.0
        %563 = vmatpush1.msra.mxu0 %v481
        %564 = vmatprep.subr.mxu0 0.0
        %565 = vmatpush1.msra.mxu0 %v482
        %566 = vmatprep.subr.mxu0 0.0
        %567 = vmatpush1.msra.mxu0 %v483
        %568 = vmatprep.subr.mxu0 0.0
        %569 = vmatpush1.msra.mxu0 %v484
        %570 = vmatprep.subr.mxu0 0.0
        %571 = vmatpush1.msra.mxu0 %v485
        %572 = vmatprep.subr.mxu0 0.0
        %573 = vmatpush1.msra.mxu0 %v486
        %574 = vmatprep.subr.mxu0 0.0
        %575 = vmatpush1.msra.mxu0 %v487
        %576 = vmatprep.subr.mxu0 0.0
        %577 = vmatpush1.msra.mxu0 %v488
        %578 = vmatprep.subr.mxu0 0.0
        %579 = vmatpush1.msra.mxu0 %v489
        %580 = vmatprep.subr.mxu0 0.0
        %581 = vmatpush1.msra.mxu0 %v490
        %582 = vmatprep.subr.mxu0 0.0
        %583 = vmatpush1.msra.mxu0 %v491
        %584 = vmatprep.subr.mxu0 0.0
        %585 = vmatpush1.msra.mxu0 %v492
        %586 = vmatprep.subr.mxu0 0.0
        %587 = vmatpush1.msra.mxu0 %v493
        %588 = vmatprep.subr.mxu0 0.0
        %589 = vmatpush1.msra.mxu0 %v494
        %590 = vmatprep.subr.mxu0 0.0
        %591 = vmatpush1.msra.mxu0 %v495
        %592 = vmatprep.subr.mxu0 0.0
        %593 = vmatpush1.msra.mxu0 %v496
        %594 = vmatprep.subr.mxu0 0.0
        %595 = vmatpush1.msra.mxu0 %v497
        %596 = vmatprep.subr.mxu0 0.0
        %597 = vmatpush1.msra.mxu0 %v498
        %598 = vmatprep.subr.mxu0 0.0
        %599 = vmatpush1.msra.mxu0 %v499
        %600 = vmatprep.mubr.f32.mxu0 %v533
        %601 = vmatmul.mubr.f32.gmra.mrb[0].mxu0 %v532
        %v602 = vpop.f32.mrb[0].mxu0
        %v603 = vadd.f32 0.0, %v602
        %v604 = vpop.f32.mrb[0].mxu0
        %605 = vdwg.mxu0
        %606 = vmatprep.subr.mxu0 0.0
        %607 = vmatpush1.msra.mxu0 %v500
        %608 = vmatprep.subr.mxu0 0.0
        %609 = vmatpush1.msra.mxu0 %v501
        %610 = vmatprep.subr.mxu0 0.0
        %611 = vmatpush1.msra.mxu0 %v502
        %612 = vmatprep.subr.mxu0 0.0
        %613 = vmatpush1.msra.mxu0 %v503
        %614 = vmatprep.subr.mxu0 0.0
        %615 = vmatpush1.msra.mxu0 %v504
        %616 = vmatprep.subr.mxu0 0.0
        %617 = vmatpush1.msra.mxu0 %v505
        %618 = vmatprep.subr.mxu0 0.0
        %619 = vmatpush1.msra.mxu0 %v506
        %620 = vmatprep.subr.mxu0 0.0
        %621 = vmatpush1.msra.mxu0 %v507
        %622 = vmatprep.subr.mxu0 0.0
        %623 = vmatpush1.msra.mxu0 %v508
        %624 = vmatprep.subr.mxu0 0.0
        %625 = vmatpush1.msra.mxu0 %v509
        %626 = vmatprep.subr.mxu0 0.0
        %627 = vmatpush1.msra.mxu0 %v510
        %628 = vmatprep.subr.mxu0 0.0
        %629 = vmatpush1.msra.mxu0 %v511
        %630 = vmatprep.subr.mxu0 0.0
        %631 = vmatpush1.msra.mxu0 %v512
        %632 = vmatprep.subr.mxu0 0.0
        %633 = vmatpush1.msra.mxu0 %v513
        %634 = vmatprep.subr.mxu0 0.0
        %635 = vmatpush1.msra.mxu0 %v514
        %636 = vmatprep.subr.mxu0 0.0
        %637 = vmatpush1.msra.mxu0 %v515
        %638 = vmatprep.subr.mxu0 0.0
        %639 = vmatpush1.msra.mxu0 %v516
        %640 = vmatprep.subr.mxu0 0.0
        %641 = vmatpush1.msra.mxu0 %v517
        %642 = vmatprep.subr.mxu0 0.0
        %643 = vmatpush1.msra.mxu0 %v518
        %644 = vmatprep.subr.mxu0 0.0
        %645 = vmatpush1.msra.mxu0 %v519
        %646 = vmatprep.subr.mxu0 0.0
        %647 = vmatpush1.msra.mxu0 %v520
        %648 = vmatprep.subr.mxu0 0.0
        %649 = vmatpush1.msra.mxu0 %v521
        %650 = vmatprep.subr.mxu0 0.0
        %651 = vmatpush1.msra.mxu0 %v522
        %652 = vmatprep.subr.mxu0 0.0
        %653 = vmatpush1.msra.mxu0 %v523
        %654 = vmatprep.subr.mxu0 0.0
        %655 = vmatpush1.msra.mxu0 %v524
        %656 = vmatprep.subr.mxu0 0.0
        %657 = vmatpush1.msra.mxu0 %v525
        %658 = vmatprep.subr.mxu0 0.0
        %659 = vmatpush1.msra.mxu0 %v526
        %660 = vmatprep.subr.mxu0 0.0
        %661 = vmatpush1.msra.mxu0 %v527
        %662 = vmatprep.subr.mxu0 0.0
        %663 = vmatpush1.msra.mxu0 %v528
        %664 = vmatprep.subr.mxu0 0.0
        %665 = vmatpush1.msra.mxu0 %v529
        %666 = vmatprep.subr.mxu0 0.0
        %667 = vmatpush1.msra.mxu0 %v530
        %668 = vmatprep.subr.mxu0 0.0
        %669 = vmatpush1.msra.mxu0 %v531
        %670 = vmatprep.mubr.f32.mxu0 %v535
        %671 = vmatmul.mubr.f32.gmra.mrb[0].mxu0 %v534
        %v672 = vpop.f32.mrb[0].mxu0
        %v673 = vadd.f32 %v603, %v672
        %v674 = vpop.f32.mrb[0].mxu0
        %675 = vdwg.mxu0
        %676 = vst [vmem:[%s194] sm:$0xff] %v673
        %s677 = sand.u32 %s95, 1
        %s678 = scalar_lea.sflag [#allocation4], %s677
        %s679 = sand.u32 %s95, 1
        %s680 = smul.addr %s679, 8
        %s681 = scalar_lea.vmem [#allocation5], %s680
        // Predicated region
        $region33: #{tpu_custom_call.1} parent=27 // pred_check
          %p682 = pneg %p105
        $region34: #{tpu_custom_call.1} parent=27 // pred_check_branch
          %684 = sbr.rel (%p682) target = $region36
        $region35: #{tpu_custom_call.1} parent=27 // pred_region
          %s686 = ssub.s32 128, 128
          %687 = vsyncadd %s678, %s686
          %s688 = sadd.s32 %s24, %s23
          %s689 = smul.addr %s688, 128
          %s690 = scalar_lea.hbm %s2, %s689
          %s692 = sshll.u32 %s681, 4
          %s693 = int_to_ptr.vmem [resolvable:$true] %s692
          %695 = dma.vmem_to_hbm [thread:$0]  %s693, 128, %s690, %s678
        $region36: #{tpu_custom_call.1} parent=27 // pred_fallthru
          _
      $region28: #{tpu_custom_call.1} parent=5 // pred_fallthru
        _
      %p696 = scmp.le.s32.totalorder 2, %s14
      // Predicated region
      $region37: #{tpu_custom_call.1} parent=5 // pred_check
        %p697 = pneg %p696
      $region38: #{tpu_custom_call.1} parent=5 // pred_check_branch
        %699 = sbr.rel (%p697) target = $region40
      $region39: #{tpu_custom_call.1} parent=5 // pred_region
        %s700 = ssub.s32 %s14, 2
        // Predicated region
        $region41: #{tpu_custom_call.1} parent=39 // pred_check
          %p701 = pneg %p111
        $region42: #{tpu_custom_call.1} parent=39 // pred_check_branch
          %703 = sbr.rel (%p701) target = $region44
        $region43: #{tpu_custom_call.1} parent=39 // pred_region
          %s704 = sand.u32 %s96, 1
          %s705 = scalar_lea.sflag [#allocation4], %s704
          %s706 = sand.u32 %s96, 1
          %s707 = smul.addr %s706, 8
          %s708 = scalar_lea.vmem [#allocation5], %s707
          %709 = dma.done %s705, 128
        $region44: #{tpu_custom_call.1} parent=39 // pred_fallthru
          _
      $region40: #{tpu_custom_call.1} parent=5 // pred_fallthru
        _
    $region6: #{tpu_custom_call.1} parent=1 // loop_footer
      %s18 = sadd.s32 1, %s14
    $region7: #{tpu_custom_call.1} parent=1 // loop_footer_branch
      %13 = sbr.rel target = $region3
    $region8: #{tpu_custom_call.1} parent=1 // loop_exit
      _
    %710 = vsyncpa [#allocation3], 1
    %s711 = scalar_lea.sflag [#allocation3], 1
    %712 = vsyncpa %s711, 1
    %713 = vsyncpa [#allocation4], 1
    %s714 = scalar_lea.sflag [#allocation4], 1
    %715 = vsyncpa %s714, 1

</llo_original>
